<compile_context>
chip_gen: v7x
topology: tpu7x:2x2x1
jax: 0.10.0
libtpu: 0.0.40
codegen_flags: <defaults>
</compile_context>

<pallas_src>
import functools

import jax
import jax.numpy as jnp
import numpy as np
from jax.experimental import pallas as pl
from jax.experimental.pallas import tpu as pltpu

LN_EPS = 1e-5
ROW_ALIGN = 16  # bf16 sublane packing granularity for the second-to-minor dim


def _round_up(x, m):
    return ((x + m - 1) // m) * m


# ---------------------------------------------------------------------------
# Glue: shifted copies + channel concat + patch rearrange (pure layout ops).
# All four SPT shifts are corner crops of a single zero-padded tensor, so XLA
# emits the chain (pad + slices + concat + transpose) as one fusion, in the
# dtype of `x` (bf16 on the kernel path).
# ---------------------------------------------------------------------------
def _build_patch_tokens(x, patch_size):
    """x: (B, C, H, W) -> (B, num_patches, patch_size*patch_size*5*C)."""
    B, C, H, W = x.shape
    p = patch_size
    s = p // 2
    xp = jnp.pad(x, ((0, 0), (0, 0), (s, s), (s, s)))  # pad s on every side
    # torch F.pad shift -> read offset (H, W) into xp:
    #   ( s,-s, s,-s) -> (0 , 0 )
    #   (-s, s,-s, s) -> (2s, 2s)
    #   (-s, s, s,-s) -> (0 , 2s)
    #   ( s,-s,-s, s) -> (2s, 0 )
    crops = [
        xp[:, :, 0:H, 0:W],
        xp[:, :, 2 * s:2 * s + H, 2 * s:2 * s + W],
        xp[:, :, 0:H, 2 * s:2 * s + W],
        xp[:, :, 2 * s:2 * s + H, 0:W],
    ]
    x_cat = jnp.concatenate((x, *crops), axis=1)            # (B, 5C, H, W)
    C5 = 5 * C
    h, w = H // p, W // p
    # Rearrange 'b c (h p1) (w p2) -> b (h w) (p1 p2 c)'
    xr = x_cat.reshape(B, C5, h, p, w, p)                   # b c h p1 w p2
    xr = jnp.transpose(xr, (0, 2, 4, 3, 5, 1))              # b h w p1 p2 c
    return xr.reshape(B, h * w, p * p * C5)


# ---------------------------------------------------------------------------
# Pallas kernel: fused LayerNorm (affine pre-folded into w/b) + Linear.
# ---------------------------------------------------------------------------
def _ln_linear_kernel(x_ref, w_ref, b_ref, o_ref):
    x = x_ref[...].astype(jnp.float32)                      # (TILE, patch_dim)
    mean = jnp.mean(x, axis=-1, keepdims=True)
    diff = x - mean
    var = jnp.mean(diff * diff, axis=-1, keepdims=True)
    xn = diff * jax.lax.rsqrt(var + LN_EPS)                 # un-affine LN
    # bf16 x bf16 inputs, f32 accumulation on the MXU.
    y = jnp.dot(xn.astype(jnp.bfloat16), w_ref[...],
                preferred_element_type=jnp.float32)
    o_ref[...] = (y + b_ref[...]).astype(o_ref.dtype)


def spt_forward(x, params, *, patch_size, row_tile=4096):
    """SPT forward.  x: (B, C, H, W) float32 NCHW.  Returns (B, N, dim) f32."""
    # Build the token tensor in bf16 (halves its HBM write + kernel read).
    tokens = _build_patch_tokens(x.astype(jnp.bfloat16), patch_size)
    B, N, patch_dim = tokens.shape
    dim = params["w"].shape[0]                               # Linear: (dim, patch_dim)

    rows = B * N
    flat = tokens.reshape(rows, patch_dim)

    # Pad rows to the bf16 sublane granularity so any TILE choice lowers
    # cleanly; remainder blocks still use Pallas edge masking.
    rows_p = _round_up(rows, ROW_ALIGN)
    if rows_p != rows:
        flat = jnp.pad(flat, ((0, rows_p - rows), (0, 0)))
    tile = min(_round_up(row_tile, ROW_ALIGN), rows_p)
    grid = pl.cdiv(rows_p, tile)

    # Fold the LayerNorm affine into the linear layer (exact, done in f32).
    gamma = params["ln_gamma"].astype(jnp.float32)
    beta = params["ln_beta"].astype(jnp.float32)
    w_t = params["w"].T.astype(jnp.float32)                  # (patch_dim, dim)
    w_fold = (gamma[:, None] * w_t).astype(jnp.bfloat16)     # (patch_dim, dim)
    b_fold = (beta @ w_t + params["b"].astype(jnp.float32)).reshape(1, dim)

    out = pl.pallas_call(
        _ln_linear_kernel,
        out_shape=jax.ShapeDtypeStruct((rows_p, dim), jnp.float32),
        grid_spec=pltpu.PrefetchScalarGridSpec(
            num_scalar_prefetch=0,
            grid=(grid,),
            in_specs=[
                # Streamed bf16 token tile.
                pl.BlockSpec((tile, patch_dim), lambda i: (i, 0)),
                # VMEM-resident params (constant index_map => fetched once).
                pl.BlockSpec((patch_dim, dim), lambda i: (0, 0)),
                pl.BlockSpec((1, dim), lambda i: (0, 0)),
            ],
            # Block spans the full feature dim -> contiguous HBM writeback.
            out_specs=pl.BlockSpec((tile, dim), lambda i: (i, 0)),
        ),
        compiler_params=pltpu.CompilerParams(
            # Row axis is embarrassingly parallel (megacore-shardable).
            dimension_semantics=("parallel",),
            # ~24 MiB working set at tile=4096; 32 MiB raises v5e's 16 MiB
            # scoped default and is safely below physical VMEM on all gens.
            vmem_limit_bytes=32 * 1024 * 1024,
            # Best-effort hint only; a transpose-heavy producer may not fuse.
            allow_input_fusion=[True, False, False],
        ),
    )(flat, w_fold, b_fold)

    return out[:rows].reshape(B, N, dim)


# ---------------------------------------------------------------------------
# Pure-JAX f32 reference (independent glue implementation, mirrors torch code).
# ---------------------------------------------------------------------------
def _shift_pad(x, left, right, top, bottom):
    x = jnp.pad(
        x,
        ((0, 0), (0, 0),
         (max(top, 0), max(bottom, 0)),
         (max(left, 0), max(right, 0))),
    )
    hs = max(-top, 0)
    he = x.shape[2] - max(-bottom, 0)
    ws = max(-left, 0)
    we = x.shape[3] - max(-right, 0)
    return x[:, :, hs:he, ws:we]


def _build_patch_tokens_ref(x, patch_size):
    s = patch_size // 2
    shifts = ((1, -1, 1, -1), (-1, 1, -1, 1), (-1, 1, 1, -1), (1, -1, -1, 1))
    shifts = tuple(tuple(s * i for i in sh) for sh in shifts)
    shifted = [_shift_pad(x, *sh) for sh in shifts]
    x_cat = jnp.concatenate((x, *shifted), axis=1)
    B, C5, H, W = x_cat.shape
    p = patch_size
    h, w = H // p, W // p
    xr = x_cat.reshape(B, C5, h, p, w, p)
    xr = jnp.transpose(xr, (0, 2, 4, 3, 5, 1))
    return xr.reshape(B, h * w, p * p * C5)


def spt_reference(x, params, *, patch_size):
    tokens = _build_patch_tokens_ref(x, patch_size)
    mean = jnp.mean(tokens, axis=-1, keepdims=True)
    var = jnp.mean((tokens - mean) ** 2, axis=-1, keepdims=True)
    xn = (tokens - mean) * jax.lax.rsqrt(var + LN_EPS)
    xn = xn * params["ln_gamma"] + params["ln_beta"]
    return xn @ params["w"].T + params["b"]


if __name__ == "__main__":
    # Small shapes consistent with the module: B=2, C=4, H=W=16, patch=4, dim=32
    B, C, H, W = 2, 4, 16, 16
    patch_size = 4
    dim = 32
    patch_dim = patch_size * patch_size * 5 * C   # 320

    key = jax.random.PRNGKey(0)
    kx, kg, kb, kw, kbi = jax.random.split(key, 5)

    x = jax.random.normal(kx, (B, C, H, W), dtype=jnp.float32)
    params = {
        "ln_gamma": 1.0 + 0.1 * jax.random.normal(kg, (patch_dim,), jnp.float32),
        "ln_beta": 0.1 * jax.random.normal(kb, (patch_dim,), jnp.float32),
        "w": jax.random.normal(kw, (dim, patch_dim), jnp.float32) / np.sqrt(patch_dim),
        "b": 0.1 * jax.random.normal(kbi, (dim,), jnp.float32),
    }

    fwd = jax.jit(functools.partial(spt_forward, patch_size=patch_size))
    out = jax.block_until_ready(fwd(x, params))

    ref = spt_reference(x, params, patch_size=patch_size)
    assert out.shape == (B, (H // patch_size) * (W // patch_size), dim)
    # Tokens / matmul operands are streamed in bf16 (LN math and accumulation
    # in f32), so compare against the all-f32 reference at bf16-level tolerance.
    np.testing.assert_allclose(np.asarray(out), np.asarray(ref), rtol=5e-2, atol=5e-2)

    print("KERNEL_OK")
</pallas_src>

<mosaic_0001>
module attributes {stable_mosaic.version = 11 : i64} {
  func.func @_ln_linear_kernel(%arg0: i32, %arg1: memref<32x320xbf16, #tpu.memory_space<vmem>>, %arg2: memref<320x32xbf16, #tpu.memory_space<vmem>>, %arg3: memref<1x32xf32, #tpu.memory_space<vmem>>, %arg4: memref<32x32xf32, #tpu.memory_space<vmem>>) attributes {dimension_semantics = [#tpu.dimension_semantics<parallel>], iteration_bounds = array<i64: 1>, scalar_prefetch = 0 : i64, scratch_operands = 0 : i64, tpu.core_type = #tpu.core_type<tc>, window_params = [{transform_indices = @transform_0, window_bounds = array<i64: 32, 320>}, {pipeline_mode = #tpu.pipeline_mode<synchronous>, transform_indices = @transform_1, window_bounds = array<i64: 320, 32>}, {pipeline_mode = #tpu.pipeline_mode<synchronous>, transform_indices = @transform_2, window_bounds = array<i64: 1, 32>}, {transform_indices = @transform_3, window_bounds = array<i64: 32, 32>}]} {
    %c0 = arith.constant 0 : index
    %c0_0 = arith.constant 0 : index
    %0 = vector.load %arg1[%c0, %c0_0] : memref<32x320xbf16, #tpu.memory_space<vmem>>, vector<32x320xbf16>
    %1 = arith.extf %0 : vector<32x320xbf16> to vector<32x320xf32>
    %cst = arith.constant dense<0.000000e+00> : vector<32xf32>
    %2 = vector.multi_reduction <add>, %1, %cst [1] : vector<32x320xf32> to vector<32xf32>
    %3 = vector.shape_cast %2 : vector<32xf32> to vector<32x1xf32>
    %cst_1 = arith.constant 3.200000e+02 : f32
    %4 = vector.broadcast %cst_1 : f32 to vector<32x1xf32>
    %5 = arith.divf %3, %4 : vector<32x1xf32>
    %6 = vector.broadcast %5 : vector<32x1xf32> to vector<32x320xf32>
    %7 = arith.subf %1, %6 : vector<32x320xf32>
    %8 = arith.mulf %7, %7 : vector<32x320xf32>
    %cst_2 = arith.constant dense<0.000000e+00> : vector<32xf32>
    %9 = vector.multi_reduction <add>, %8, %cst_2 [1] : vector<32x320xf32> to vector<32xf32>
    %10 = vector.shape_cast %9 : vector<32xf32> to vector<32x1xf32>
    %cst_3 = arith.constant 3.200000e+02 : f32
    %11 = vector.broadcast %cst_3 : f32 to vector<32x1xf32>
    %12 = arith.divf %10, %11 : vector<32x1xf32>
    %cst_4 = arith.constant 9.99999974E-6 : f32
    %13 = vector.broadcast %cst_4 : f32 to vector<32x1xf32>
    %14 = arith.addf %12, %13 : vector<32x1xf32>
    %15 = math.rsqrt %14 : vector<32x1xf32>
    %16 = vector.broadcast %15 : vector<32x1xf32> to vector<32x320xf32>
    %17 = arith.mulf %7, %16 : vector<32x320xf32>
    %18 = arith.truncf %17 : vector<32x320xf32> to vector<32x320xbf16>
    %c0_5 = arith.constant 0 : index
    %c0_6 = arith.constant 0 : index
    %19 = vector.load %arg2[%c0_5, %c0_6] : memref<320x32xbf16, #tpu.memory_space<vmem>>, vector<320x32xbf16>
    %cst_7 = arith.constant dense<0.000000e+00> : vector<32x32xf32>
    %20 = tpu.matmul %18, %19, %cst_7 {dimension_numbers = #tpu.dot_dimension_numbers<[1], [0], [0], [1], [0, 0, 1, 1], [], []>} : vector<32x320xbf16>, vector<320x32xbf16>, vector<32x32xf32> -> vector<32x32xf32>
    %c0_8 = arith.constant 0 : index
    %c0_9 = arith.constant 0 : index
    %21 = vector.load %arg3[%c0_8, %c0_9] : memref<1x32xf32, #tpu.memory_space<vmem>>, vector<1x32xf32>
    %22 = vector.broadcast %21 : vector<1x32xf32> to vector<32x32xf32>
    %23 = arith.addf %20, %22 : vector<32x32xf32>
    %c0_10 = arith.constant 0 : index
    %c0_11 = arith.constant 0 : index
    %24 = vector.load %arg4[%c0_10, %c0_11] : memref<32x32xf32, #tpu.memory_space<vmem>>, vector<32x32xf32>
    tpu.vector_store %arg4[%c0_10, %c0_11], %23 {strides = array<i32>} : memref<32x32xf32, #tpu.memory_space<vmem>>, vector<32x32xf32>,
    return
  }
  func.func @transform_0(%arg0: i32) -> (i32, i32) {
    %c0_i32 = arith.constant 0 : i32
    %c0_i32_0 = arith.constant 0 : i32
    return %arg0, %c0_i32 : i32, i32
  }
  func.func @transform_1(%arg0: i32) -> (i32, i32) {
    %c0_i32 = arith.constant 0 : i32
    %c0_i32_0 = arith.constant 0 : i32
    %c0_i32_1 = arith.constant 0 : i32
    return %c0_i32, %c0_i32_0 : i32, i32
  }
  func.func @transform_2(%arg0: i32) -> (i32, i32) {
    %c0_i32 = arith.constant 0 : i32
    %c0_i32_0 = arith.constant 0 : i32
    %c0_i32_1 = arith.constant 0 : i32
    return %c0_i32, %c0_i32_0 : i32, i32
  }
  func.func @transform_3(%arg0: i32) -> (i32, i32) {
    %c0_i32 = arith.constant 0 : i32
    %c0_i32_0 = arith.constant 0 : i32
    return %arg0, %c0_i32 : i32, i32
  }
}

</mosaic_0001>

<llo_original>
// kernel: spt_forward.1
$region0: #{spt_forward.1}
  #allocation0 [shape = 'u32[]', space=smem, size = 0x4, offset = 0x4, fixed_abs, tag = 'smem constant byte address 0x4 - core index']
  #allocation1 [shape = 'u32[144,128]{1,0:T(1,128)}', space=vmem, size = 0x12000, scoped, tag = 'internal scratch']
  %s0 = inlined_call_operand.vmem [shape: bf16[32,320], index: 0, kind: input, shape index: {}]
  %s1 = inlined_call_operand.vmem [shape: bf16[320,32], index: 1, kind: input, shape index: {}]
  %s2 = inlined_call_operand.vmem [shape: f32[1,32], index: 2, kind: input, shape index: {}]
  %s3 = inlined_call_operand.hbm [shape: f32[32,32], index: 3, kind: output, shape index: {}]
  %s4 = sld [smem:[#allocation0]]
  $region22: #{spt_forward.1} parent=0
    _
  %s6 = ssub.s32 1, %s4
  %s7 = scalar_select 0, %s6, %s4
  $region1: #{spt_forward.1} parent=0
    #allocation2 [shape = 'u8[16384]{0}', space=vmem, size = 0x4000, scoped, tag = 'output window, operand 0, single buffered']
    #allocation3 [shape = 's32[1]{0}', space=sflag, size = 0x4, scoped, tag = 'scoped memory for spt_forward.1']
    %8 = vsyncpa [#allocation3], 0
    // Predicated region
    $region2: #{spt_forward.1} parent=1 // pred_check
      _
    $region3: #{spt_forward.1} parent=1 // pred_check_branch
      %10 = sbr.rel (0) target = $region5
    $region4: #{spt_forward.1} parent=1 // pred_region
      _
    $region5: #{spt_forward.1} parent=1 // pred_fallthru
      _
    // Predicated region
    $region6: #{spt_forward.1} parent=1 // pred_check
      _
    $region7: #{spt_forward.1} parent=1 // pred_check_branch
      %12 = sbr.rel (0) target = $region9
    $region8: #{spt_forward.1} parent=1 // pred_region
      _
    $region9: #{spt_forward.1} parent=1 // pred_fallthru
      _
    // Predicated region
    $region10: #{spt_forward.1} parent=1 // pred_check
      _
    $region11: #{spt_forward.1} parent=1 // pred_check_branch
      %14 = sbr.rel (0) target = $region13
    $region12: #{spt_forward.1} parent=1 // pred_region
      _
    $region13: #{spt_forward.1} parent=1 // pred_fallthru
      _
    %v16 = vld [vmem:[%s0] sm:$0xff]
    %v17 = vld [vmem:[%s0 + $0x8] sm:$0xf]
    %v18 = vld [vmem:[%s0 + $0xc] sm:$0xff]
    %v19 = vld [vmem:[%s0 + $0x14] sm:$0xf]
    %v20 = vld [vmem:[%s0 + $0x18] sm:$0xff]
    %v21 = vld [vmem:[%s0 + $0x20] sm:$0xf]
    %v22 = vld [vmem:[%s0 + $0x24] sm:$0xff]
    %v23 = vld [vmem:[%s0 + $0x2c] sm:$0xf]
    %v24 = vunpack.c.l.bf16 %v16
    %v25 = vunpack.c.h.bf16 %v16
    %v26 = vunpack.c.l.bf16 %v17
    %v27 = vunpack.c.l.bf16 %v18
    %v28 = vunpack.c.h.bf16 %v18
    %v29 = vunpack.c.l.bf16 %v19
    %v30 = vunpack.c.l.bf16 %v20
    %v31 = vunpack.c.h.bf16 %v20
    %v32 = vunpack.c.l.bf16 %v21
    %v33 = vunpack.c.l.bf16 %v22
    %v34 = vunpack.c.h.bf16 %v22
    %v35 = vunpack.c.l.bf16 %v23
    %v36 = vadd.f32 %v24, %v25
    %vm37 = vcmask 523264
    %v38 = vsel %vm37, %v26, 0.0
    %v39 = vadd.f32 %v36, %v38
    %40 = vadd.xlane.f32.xlu0 %v39
    %v41 = vpop.xlane.xlu0 %40
    %v42 = vadd.f32 %v27, %v28
    %v43 = vsel %vm37, %v29, 0.0
    %v44 = vadd.f32 %v42, %v43
    %45 = vadd.xlane.f32.xlu0 %v44
    %v46 = vpop.xlane.xlu0 %45
    %v47 = vadd.f32 %v30, %v31
    %v48 = vsel %vm37, %v32, 0.0
    %v49 = vadd.f32 %v47, %v48
    %50 = vadd.xlane.f32.xlu0 %v49
    %v51 = vpop.xlane.xlu0 %50
    %v52 = vadd.f32 %v33, %v34
    %v53 = vsel %vm37, %v35, 0.0
    %v54 = vadd.f32 %v52, %v53
    %55 = vadd.xlane.f32.xlu0 %v54
    %v56 = vpop.xlane.xlu0 %55
    %v57 = vrcp.pop 320.0
    %v58 = vmul.f32 %v41, %v57
    %v59 = vmul.f32 %v46, %v57
    %v60 = vmul.f32 %v51, %v57
    %v61 = vmul.f32 %v56, %v57
    %v62 = vsub.f32 %v24, %v58
    %v63 = vsub.f32 %v25, %v58
    %v64 = vsub.f32 %v26, %v58
    %v65 = vsub.f32 %v27, %v59
    %v66 = vsub.f32 %v28, %v59
    %v67 = vsub.f32 %v29, %v59
    %v68 = vsub.f32 %v30, %v60
    %v69 = vsub.f32 %v31, %v60
    %v70 = vsub.f32 %v32, %v60
    %v71 = vsub.f32 %v33, %v61
    %v72 = vsub.f32 %v34, %v61
    %v73 = vsub.f32 %v35, %v61
    %v74 = vmul.f32 %v62, %v62
    %v75 = vmul.f32 %v63, %v63
    %v76 = vmul.f32 %v64, %v64
    %v77 = vmul.f32 %v65, %v65
    %v78 = vmul.f32 %v66, %v66
    %v79 = vmul.f32 %v67, %v67
    %v80 = vmul.f32 %v68, %v68
    %v81 = vmul.f32 %v69, %v69
    %v82 = vmul.f32 %v70, %v70
    %v83 = vmul.f32 %v71, %v71
    %v84 = vmul.f32 %v72, %v72
    %v85 = vmul.f32 %v73, %v73
    %v86 = vadd.f32 %v74, %v75
    %v87 = vsel %vm37, %v76, 0.0
    %v88 = vadd.f32 %v86, %v87
    %89 = vadd.xlane.f32.xlu0 %v88
    %v90 = vpop.xlane.xlu0 %89
    %v91 = vadd.f32 %v77, %v78
    %v92 = vsel %vm37, %v79, 0.0
    %v93 = vadd.f32 %v91, %v92
    %94 = vadd.xlane.f32.xlu0 %v93
    %v95 = vpop.xlane.xlu0 %94
    %v96 = vadd.f32 %v80, %v81
    %v97 = vsel %vm37, %v82, 0.0
    %v98 = vadd.f32 %v96, %v97
    %99 = vadd.xlane.f32.xlu0 %v98
    %v100 = vpop.xlane.xlu0 %99
    %v101 = vadd.f32 %v83, %v84
    %v102 = vsel %vm37, %v85, 0.0
    %v103 = vadd.f32 %v101, %v102
    %104 = vadd.xlane.f32.xlu0 %v103
    %v105 = vpop.xlane.xlu0 %104
    %v106 = vmul.f32 %v90, %v57
    %v107 = vmul.f32 %v95, %v57
    %v108 = vmul.f32 %v100, %v57
    %v109 = vmul.f32 %v105, %v57
    %v110 = vadd.f32 %v106, 1e-05
    %v111 = vadd.f32 %v107, 1e-05
    %v112 = vadd.f32 %v108, 1e-05
    %v113 = vadd.f32 %v109, 1e-05
    %v114 = vrsqrt.pop %v110
    %v115 = vrsqrt.pop %v111
    %v116 = vrsqrt.pop %v112
    %v117 = vrsqrt.pop %v113
    %v118 = vmul.f32 %v62, %v114
    %v119 = vmul.f32 %v63, %v114
    %v120 = vmul.f32 %v64, %v114
    %v121 = vmul.f32 %v65, %v115
    %v122 = vmul.f32 %v66, %v115
    %v123 = vmul.f32 %v67, %v115
    %v124 = vmul.f32 %v68, %v116
    %v125 = vmul.f32 %v69, %v116
    %v126 = vmul.f32 %v70, %v116
    %v127 = vmul.f32 %v71, %v117
    %v128 = vmul.f32 %v72, %v117
    %v129 = vmul.f32 %v73, %v117
    %v130 = vpack.c.bf16 %v121, %v118
    %v131 = vpack.c.bf16 %v122, %v119
    %v132 = vpack.c.bf16 %v123, %v120
    %v133 = vpack.c.bf16 %v127, %v124
    %v134 = vpack.c.bf16 %v128, %v125
    %v135 = vpack.c.bf16 %v129, %v126
    %v136 = vld [vmem:[%s1] sm:$0xf]
    %v137 = vld [vmem:[%s1 + $0x4] sm:$0xf]
    %v138 = vld [vmem:[%s1 + $0x8] sm:$0xf]
    %v139 = vld [vmem:[%s1 + $0xc] sm:$0xf]
    %v140 = vld [vmem:[%s1 + $0x10] sm:$0xf]
    %v141 = vld [vmem:[%s1 + $0x14] sm:$0xf]
    %v142 = vld [vmem:[%s1 + $0x18] sm:$0xf]
    %v143 = vld [vmem:[%s1 + $0x1c] sm:$0xf]
    %v144 = vld [vmem:[%s1 + $0x20] sm:$0xf]
    %v145 = vld [vmem:[%s1 + $0x24] sm:$0xf]
    %v146 = vld [vmem:[%s1 + $0x28] sm:$0xf]
    %v147 = vld [vmem:[%s1 + $0x2c] sm:$0xf]
    %v148 = vld [vmem:[%s1 + $0x30] sm:$0xf]
    %v149 = vld [vmem:[%s1 + $0x34] sm:$0xf]
    %v150 = vld [vmem:[%s1 + $0x38] sm:$0xf]
    %v151 = vld [vmem:[%s1 + $0x3c] sm:$0xf]
    %v152 = vld [vmem:[%s1 + $0x40] sm:$0xf]
    %v153 = vld [vmem:[%s1 + $0x44] sm:$0xf]
    %v154 = vld [vmem:[%s1 + $0x48] sm:$0xf]
    %v155 = vld [vmem:[%s1 + $0x4c] sm:$0xf]
    %v156 = vld [vmem:[%s1 + $0x50] sm:$0xf]
    %v157 = vld [vmem:[%s1 + $0x54] sm:$0xf]
    %v158 = vld [vmem:[%s1 + $0x58] sm:$0xf]
    %v159 = vld [vmem:[%s1 + $0x5c] sm:$0xf]
    %v160 = vld [vmem:[%s1 + $0x60] sm:$0xf]
    %v161 = vld [vmem:[%s1 + $0x64] sm:$0xf]
    %v162 = vld [vmem:[%s1 + $0x68] sm:$0xf]
    %v163 = vld [vmem:[%s1 + $0x6c] sm:$0xf]
    %v164 = vld [vmem:[%s1 + $0x70] sm:$0xf]
    %v165 = vld [vmem:[%s1 + $0x74] sm:$0xf]
    %v166 = vld [vmem:[%s1 + $0x78] sm:$0xf]
    %v167 = vld [vmem:[%s1 + $0x7c] sm:$0xf]
    %v168 = vld [vmem:[%s1 + $0x80] sm:$0xf]
    %v169 = vld [vmem:[%s1 + $0x84] sm:$0xf]
    %v170 = vld [vmem:[%s1 + $0x88] sm:$0xf]
    %v171 = vld [vmem:[%s1 + $0x8c] sm:$0xf]
    %v172 = vld [vmem:[%s1 + $0x90] sm:$0xf]
    %v173 = vld [vmem:[%s1 + $0x94] sm:$0xf]
    %v174 = vld [vmem:[%s1 + $0x98] sm:$0xf]
    %v175 = vld [vmem:[%s1 + $0x9c] sm:$0xf]
    %v176 = vld [vmem:[%s2] sm:$0x1]
    %v178 = vlaneseq
    %v179 = vshrl.u32 %v178, 7
    %v180 = vsub.s32 0, %v179
    %v181 = vrot.slane %v176, %v180
    %v223 = vunpack.c.l.b16 %v136
    %v224 = vunpack.c.l.b16 %v137
    %v225 = vunpack.c.l.b16 %v138
    %v226 = vunpack.c.l.b16 %v139
    %v227 = vunpack.c.l.b16 %v140
    %v228 = vunpack.c.l.b16 %v141
    %v229 = vunpack.c.l.b16 %v142
    %v230 = vunpack.c.l.b16 %v143
    %v231 = vunpack.c.l.b16 %v144
    %v232 = vunpack.c.l.b16 %v145
    %v233 = vunpack.c.l.b16 %v146
    %v234 = vunpack.c.l.b16 %v147
    %v235 = vunpack.c.l.b16 %v148
    %v236 = vunpack.c.l.b16 %v149
    %v237 = vunpack.c.l.b16 %v150
    %v238 = vunpack.c.l.b16 %v151
    %v239 = vunpack.c.l.b16 %v152
    %v240 = vunpack.c.l.b16 %v153
    %v241 = vunpack.c.l.b16 %v154
    %v242 = vunpack.c.l.b16 %v155
    %v243 = vunpack.c.l.b16 %v156
    %v244 = vunpack.c.l.b16 %v157
    %v245 = vunpack.c.l.b16 %v158
    %v246 = vunpack.c.l.b16 %v159
    %v247 = vunpack.c.l.b16 %v160
    %v248 = vunpack.c.l.b16 %v161
    %v249 = vunpack.c.l.b16 %v162
    %v250 = vunpack.c.l.b16 %v163
    %v251 = vunpack.c.l.b16 %v164
    %v252 = vunpack.c.l.b16 %v165
    %v253 = vunpack.c.l.b16 %v166
    %v254 = vunpack.c.l.b16 %v167
    %v255 = vunpack.c.l.b16 %v168
    %v256 = vunpack.c.l.b16 %v169
    %v257 = vunpack.c.l.b16 %v170
    %v258 = vunpack.c.l.b16 %v171
    %v259 = vunpack.c.l.b16 %v172
    %v260 = vunpack.c.l.b16 %v173
    %v261 = vunpack.c.l.b16 %v174
    %v262 = vunpack.c.l.b16 %v175
    %v263 = vpack.c.b16 %v224, %v223
    %v264 = vpack.c.b16 %v226, %v225
    %v265 = vpack.c.b16 %v228, %v227
    %v266 = vpack.c.b16 %v230, %v229
    %v267 = vpack.c.b16 %v232, %v231
    %v268 = vpack.c.b16 %v234, %v233
    %v269 = vpack.c.b16 %v236, %v235
    %v270 = vpack.c.b16 %v238, %v237
    %v271 = vpack.c.b16 %v240, %v239
    %v272 = vpack.c.b16 %v242, %v241
    %v273 = vpack.c.b16 %v244, %v243
    %v274 = vpack.c.b16 %v246, %v245
    %v275 = vpack.c.b16 %v248, %v247
    %v276 = vpack.c.b16 %v250, %v249
    %v277 = vpack.c.b16 %v252, %v251
    %v278 = vpack.c.b16 %v254, %v253
    %v279 = vpack.c.b16 %v256, %v255
    %v280 = vpack.c.b16 %v258, %v257
    %v281 = vpack.c.b16 %v260, %v259
    %v282 = vpack.c.b16 %v262, %v261
    %v304 = vsel %vm37, %v132, 0
    %v307 = vsel %vm37, %v135, 0
    %309 = vmatprep.subr.bf16.mxu0 0
    %310 = vmatpush1.bf16.msra.mxu0 %v263
    %311 = vmatprep.subr.bf16.mxu0 0
    %312 = vmatpush1.bf16.msra.mxu0 %v264
    %313 = vmatprep.subr.bf16.mxu0 0
    %314 = vmatpush1.bf16.msra.mxu0 %v265
    %315 = vmatprep.subr.bf16.mxu0 0
    %316 = vmatpush1.bf16.msra.mxu0 %v266
    %317 = vmatprep.subr.bf16.mxu0 0
    %318 = vmatpush1.bf16.msra.mxu0 %v267
    %319 = vmatprep.subr.bf16.mxu0 0
    %320 = vmatpush1.bf16.msra.mxu0 %v268
    %321 = vmatprep.subr.bf16.mxu0 0
    %322 = vmatpush1.bf16.msra.mxu0 %v269
    %323 = vmatprep.subr.bf16.mxu0 0
    %324 = vmatpush1.bf16.msra.mxu0 %v270
    %325 = vmatprep.subr.bf16.mxu0 0
    %326 = vmatpush1.bf16.msra.mxu0 %v271
    %327 = vmatprep.subr.bf16.mxu0 0
    %328 = vmatpush1.bf16.msra.mxu0 %v272
    %329 = vmatprep.subr.bf16.mxu0 0
    %330 = vmatpush1.bf16.msra.mxu0 %v273
    %331 = vmatprep.subr.bf16.mxu0 0
    %332 = vmatpush1.bf16.msra.mxu0 %v274
    %333 = vmatprep.subr.bf16.mxu0 0
    %334 = vmatpush1.bf16.msra.mxu0 %v275
    %335 = vmatprep.subr.bf16.mxu0 0
    %336 = vmatpush1.bf16.msra.mxu0 %v276
    %337 = vmatprep.subr.bf16.mxu0 0
    %338 = vmatpush1.bf16.msra.mxu0 %v277
    %339 = vmatprep.subr.bf16.mxu0 0
    %340 = vmatpush1.bf16.msra.mxu0 %v278
    %341 = vmatprep.mubr.bf16.mxu0 %v131
    %342 = vmatmul.mubr.bf16.gmra.mrb[0].mxu0 %v130
    %v343 = vpop.f32.mrb[0].mxu0
    %v344 = vadd.f32 %v181, %v343
    %v345 = vpop.f32.mrb[0].mxu0
    %v346 = vpop.f32.mrb[0].mxu0
    %v347 = vadd.f32 %v181, %v346
    %v348 = vpop.f32.mrb[0].mxu0
    %349 = vmatprep.mubr.bf16.mxu0 %v134
    %350 = vmatmul.mubr.bf16.gmra.mrb[0].mxu0 %v133
    %v351 = vpop.f32.mrb[0].mxu0
    %v352 = vadd.f32 %v181, %v351
    %v353 = vpop.f32.mrb[0].mxu0
    %v354 = vpop.f32.mrb[0].mxu0
    %v355 = vadd.f32 %v181, %v354
    %v356 = vpop.f32.mrb[0].mxu0
    %357 = vdwg.mxu0
    %358 = vmatprep.subr.bf16.mxu0 0
    %359 = vmatpush1.bf16.msra.mxu0 %v279
    %360 = vmatprep.subr.bf16.mxu0 0
    %361 = vmatpush1.bf16.msra.mxu0 %v280
    %362 = vmatprep.subr.bf16.mxu0 0
    %363 = vmatpush1.bf16.msra.mxu0 %v281
    %364 = vmatprep.subr.bf16.mxu0 0
    %365 = vmatpush1.bf16.msra.mxu0 %v282
    %366 = vmatprep.subr.bf16.mxu0 0
    %367 = vmatpush1.bf16.msra.mxu0 0
    %368 = vmatprep.subr.bf16.mxu0 0
    %369 = vmatpush1.bf16.msra.mxu0 0
    %370 = vmatprep.subr.bf16.mxu0 0
    %371 = vmatpush1.bf16.msra.mxu0 0
    %372 = vmatprep.subr.bf16.mxu0 0
    %373 = vmatpush1.bf16.msra.mxu0 0
    %374 = vmatprep.subr.bf16.mxu0 0
    %375 = vmatpush1.bf16.msra.mxu0 0
    %376 = vmatprep.subr.bf16.mxu0 0
    %377 = vmatpush1.bf16.msra.mxu0 0
    %378 = vmatprep.subr.bf16.mxu0 0
    %379 = vmatpush1.bf16.msra.mxu0 0
    %380 = vmatprep.subr.bf16.mxu0 0
    %381 = vmatpush1.bf16.msra.mxu0 0
    %382 = vmatprep.subr.bf16.mxu0 0
    %383 = vmatpush1.bf16.msra.mxu0 0
    %384 = vmatprep.subr.bf16.mxu0 0
    %385 = vmatpush1.bf16.msra.mxu0 0
    %386 = vmatprep.subr.bf16.mxu0 0
    %387 = vmatpush1.bf16.msra.mxu0 0
    %388 = vmatprep.subr.bf16.mxu0 0
    %389 = vmatpush1.bf16.msra.mxu0 0
    %390 = vmatprep.mubr.bf16.mxu0 0
    %391 = vmatmul.mubr.bf16.gmra.mrb[0].mxu0 %v304
    %v392 = vpop.f32.mrb[0].mxu0
    %v393 = vadd.f32 %v344, %v392
    %v394 = vpop.f32.mrb[0].mxu0
    %v395 = vpop.f32.mrb[0].mxu0
    %v396 = vadd.f32 %v347, %v395
    %v397 = vpop.f32.mrb[0].mxu0
    %398 = vmatprep.mubr.bf16.mxu0 0
    %399 = vmatmul.mubr.bf16.gmra.mrb[0].mxu0 %v307
    %v400 = vpop.f32.mrb[0].mxu0
    %v401 = vadd.f32 %v352, %v400
    %v402 = vpop.f32.mrb[0].mxu0
    %v403 = vpop.f32.mrb[0].mxu0
    %v404 = vadd.f32 %v355, %v403
    %v405 = vpop.f32.mrb[0].mxu0
    %406 = vdwg.mxu0
    %vm407 = vcmask 261120
    %408 = vst.msk [vmem:[#allocation2] sm:$0xff] %vm407, %v393
    %409 = vst.msk [vmem:[#allocation2 + $0x8] sm:$0xff] %vm407, %v396
    %410 = vst.msk [vmem:[#allocation2 + $0x10] sm:$0xff] %vm407, %v401
    %411 = vst.msk [vmem:[#allocation2 + $0x18] sm:$0xff] %vm407, %v404
    // Predicated region
    $region14: #{spt_forward.1} parent=1 // pred_check
      _
    $region15: #{spt_forward.1} parent=1 // pred_check_branch
      %413 = sbr.rel (0) target = $region17
    $region16: #{spt_forward.1} parent=1 // pred_region
      %s415 = ssub.s32 512, 512
      %416 = vsyncadd [#allocation3], %s415
      %s417 = sshll.u32 [#allocation2], 4
      %s418 = int_to_ptr.vmem [resolvable:$true] %s417
      %423 = dma.vmem_to_hbm [thread:$0]  %s418, 512, %s3, [#allocation3], 128, 128, 8
    $region17: #{spt_forward.1} parent=1 // pred_fallthru
      _
    // Predicated region
    $region18: #{spt_forward.1} parent=1 // pred_check
      _
    $region19: #{spt_forward.1} parent=1 // pred_check_branch
      %425 = sbr.rel (0) target = $region21
    $region20: #{spt_forward.1} parent=1 // pred_region
      %426 = dma.done [#allocation3], 512
    $region21: #{spt_forward.1} parent=1 // pred_fallthru
      _
    %427 = vsyncpa [#allocation3], 1

</llo_original>
